<compile_context>
chip_gen: v5e
topology: v5e:2x2
jax: 0.10.0
libtpu: 0.0.40
codegen_flags: <defaults>
</compile_context>

<pallas_src>
import jax
import jax.numpy as jnp
from jax.experimental import pallas as pl
from jax.experimental.pallas import tpu as pltpu


def _swiglu_kernel(x_ref, wgu_ref, wd_ref, o_ref, acc_ref):
    # x_ref:   (tm, dim)      token tile (same tile for every hidden step)
    # wgu_ref: (dim, 2*th)    fused [gate | up] weight slice (in, out)
    # wd_ref:  (th, dim)      down_proj weight slice (in, out)
    # o_ref:   (tm, dim)      output tile
    # acc_ref: (tm, dim) f32  accumulator, persists across the hidden grid axis
    j = pl.program_id(1)
    nj = pl.num_programs(1)
    th = wd_ref.shape[0]

    @pl.when(j == 0)
    def _init():
        acc_ref[...] = jnp.zeros_like(acc_ref)

    x = x_ref[...]
    # One MXU pass computes gate and up together (fused weight stream).
    gu = jnp.dot(x, wgu_ref[...], preferred_element_type=jnp.float32)
    gate = gu[:, :th]           # static, lane-aligned slices (th is a multiple of 128)
    up = gu[:, th:]
    # SiLU(gate) * up: sigmoid -> EUP slot, muls -> VPU, all in f32.
    h = gate * jax.nn.sigmoid(gate) * up
    # Partial down-projection for this hidden slice (f32 accumulation on the MXU).
    part = jnp.dot(h.astype(wd_ref.dtype), wd_ref[...],
                   preferred_element_type=jnp.float32)

    @pl.when(j < nj - 1)
    def _accumulate():
        acc_ref[...] += part

    @pl.when(j == nj - 1)
    def _finalize():
        # Fused epilogue: add the last partial product directly into the store,
        # skipping one (tm, dim) f32 accumulator write + reload.
        o_ref[...] = (acc_ref[...] + part).astype(o_ref.dtype)


def _round_up(x, m):
    return ((x + m - 1) // m) * m


def _sublane_multiple(dtype):
    # f32 -> 8, bf16 -> 16, int8/fp8 -> 32 rows per full (sublane, lane) tile.
    return {4: 8, 2: 16, 1: 32}.get(jnp.dtype(dtype).itemsize, 8)


def _default_tile_config():
    """Generation-aware defaults: (tm, th, physical VMEM bytes).

    tm targets the HBM roofline crossover (weights are re-streamed once per token
    tile, so arithmetic intensity == tm): ~240 rows (v5e) / ~640 (v6e) / ~310 (v7x).
    """
    try:
        vmem_cap = pltpu.get_tpu_info().vmem_capacity_bytes
    except Exception:
        vmem_cap = 64 * 1024 * 1024  # conservative fallback (works on all gens)
    if vmem_cap >= 96 * 1024 * 1024:
        # 128-MiB parts (v5e / v6e): big token + hidden tiles.
        return 768, 1024, vmem_cap
    # 64-MiB parts (v7x per-TC): stay above the ~310-row crossover while the
    # double-buffered weight tiles still fit.
    return 512, 384, vmem_cap


def swiglu_mlp(x, wg, wu, wd, *, tm=None, th=None):
    """SwiGLU MLP forward: down_proj(silu(x @ wg) * (x @ wu)).

    x:  (..., dim)
    wg: (dim, hidden)  gate_proj weight stored (in, out)  (== PyTorch weight.T)
    wu: (dim, hidden)  up_proj   weight stored (in, out)
    wd: (hidden, dim)  down_proj weight stored (in, out)
    tm: token tile (MXU rows per step); default is generation-aware.
    th: hidden tile (multiple of 128);  default is generation-aware.

    Weight prep (pad + gate/up fusion) is pure layout done with plain XLA ops; under
    jit with constant weights it folds away (real callers should hoist it to load time).
    """
    orig_shape = x.shape
    orig_dtype = x.dtype
    dim = orig_shape[-1]
    hidden = wg.shape[1]
    assert wg.shape == (dim, hidden) and wu.shape == (dim, hidden)
    assert wd.shape == (hidden, dim)

    tm_def, th_def, vmem_cap = _default_tile_config()
    tm = tm_def if tm is None else tm
    th = th_def if th is None else th

    # Cast activations to the weight dtype so both MXU passes run at the fast
    # (bf16) rate; accumulation stays f32 via preferred_element_type.
    compute_dtype = wg.dtype
    xm = x.reshape(-1, dim).astype(compute_dtype)
    M = xm.shape[0]

    # Token tile: MXU-sized, never bigger than (padded) M, rounded to the sublane
    # multiple of the compute dtype.
    sub = _sublane_multiple(compute_dtype)
    tm_eff = min(_round_up(tm, sub), _round_up(M, sub))
    M_pad = _round_up(M, tm_eff)
    if M_pad != M:
        xm = jnp.pad(xm, ((0, M_pad - M), (0, 0)))

    # Hidden tile: multiple of 128; zero-pad hidden to a multiple of it (exact).
    th_eff = min(_round_up(th, 128), _round_up(hidden, 128))
    Hp = _round_up(hidden, th_eff)
    if Hp != hidden:
        pad_h = Hp - hidden
        wg = jnp.pad(wg, ((0, 0), (0, pad_h)))
        wu = jnp.pad(wu, ((0, 0), (0, pad_h)))
        wd = jnp.pad(wd, ((0, pad_h), (0, 0)))
    nh = Hp // th_eff

    # Fuse gate/up weights into one (nh, dim, 2*th) stream: tile j holds
    # [wg[:, j*th:(j+1)*th] | wu[:, j*th:(j+1)*th]].
    wgu = jnp.concatenate(
        [wg.reshape(dim, nh, th_eff), wu.reshape(dim, nh, th_eff)], axis=-1)
    wgu = jnp.transpose(wgu, (1, 0, 2))  # (nh, dim, 2*th)

    grid = (M_pad // tm_eff, nh)
    grid_i = grid[0]

    # VMEM budget: double-buffered x / fused-weight / down-weight / output tiles,
    # f32 accumulator scratch, and the f32 gu/h/part intermediates.
    isz = jnp.dtype(compute_dtype).itemsize
    osz = jnp.dtype(orig_dtype).itemsize
    tile_bytes = (
        2 * tm_eff * dim * isz                  # x tile (double-buffered)
        + 2 * dim * 2 * th_eff * isz            # fused gate|up tile (double-buffered)
        + 2 * th_eff * dim * isz                # down_proj tile (double-buffered)
        + 2 * tm_eff * dim * osz                # output tile (double-buffered)
        + tm_eff * dim * 4                      # f32 accumulator scratch
        + tm_eff * (2 * th_eff) * 4             # gu f32 intermediate
        + tm_eff * th_eff * 4                   # h f32 intermediate
        + tm_eff * dim * 4                      # partial-product f32 intermediate
    )
    vmem_limit = int(min(0.85 * vmem_cap,
                         max(32 * 1024 * 1024, 1.3 * tile_bytes)))

    cost = pl.CostEstimate(
        flops=6 * M_pad * dim * Hp,             # three GEMMs of M x dim x hidden
        transcendentals=M_pad * Hp,             # sigmoid
        bytes_accessed=(M_pad * dim * isz                    # activations read once
                        + grid_i * 3 * dim * Hp * isz        # weights re-streamed per token tile
                        + M_pad * dim * osz),                # output writeback
    )

    out = pl.pallas_call(
        _swiglu_kernel,
        out_shape=jax.ShapeDtypeStruct((M_pad, dim), orig_dtype),
        grid_spec=pltpu.PrefetchScalarGridSpec(
            num_scalar_prefetch=0,
            grid=grid,
            in_specs=[
                pl.BlockSpec((tm_eff, dim), lambda i, j: (i, 0)),            # x token tile
                pl.BlockSpec((None, dim, 2 * th_eff), lambda i, j: (j, 0, 0)),  # fused gate|up slice
                pl.BlockSpec((th_eff, dim), lambda i, j: (j, 0)),            # down_proj slice
            ],
            out_specs=pl.BlockSpec((tm_eff, dim), lambda i, j: (i, 0)),
            scratch_shapes=[pltpu.VMEM((tm_eff, dim), jnp.float32)],
        ),
        compiler_params=pltpu.CompilerParams(
            dimension_semantics=("parallel", "arbitrary"),
            vmem_limit_bytes=vmem_limit,
        ),
        cost_estimate=cost,
    )(xm, wgu, wd)

    if M_pad != M:
        out = out[:M]
    # dropout(p=0.0) is the identity -> nothing to do.
    return out.reshape(orig_shape)


if __name__ == "__main__":
    # Small shapes consistent with the module: batch=2, seq=8, dim=32, hidden=dim*4=128.
    batch, seq, dim = 2, 8, 32
    hidden = dim * 4

    key = jax.random.PRNGKey(0)
    kx, kg, ku, kd = jax.random.split(key, 4)

    x = jax.random.normal(kx, (batch, seq, dim), dtype=jnp.float32)
    # Deterministic "Linear" weights, stored directly as (in, out) == PyTorch weight.T.
    wg = jax.random.normal(kg, (dim, hidden), dtype=jnp.float32) * (1.0 / dim**0.5)
    wu = jax.random.normal(ku, (dim, hidden), dtype=jnp.float32) * (1.0 / dim**0.5)
    wd = jax.random.normal(kd, (hidden, dim), dtype=jnp.float32) * (1.0 / hidden**0.5)

    out = jax.jit(swiglu_mlp)(x, wg, wu, wd)
    out = jax.block_until_ready(out)

    # Pure-JAX reference check (f32 weights -> tight tolerance).
    gate = x @ wg
    ref = (gate * jax.nn.sigmoid(gate) * (x @ wu)) @ wd
    assert out.shape == x.shape
    assert jnp.allclose(out, ref, atol=1e-4, rtol=1e-4)

    print("KERNEL_OK")
</pallas_src>

<mosaic_0001>
module attributes {stable_mosaic.version = 11 : i64} {
  func.func @_swiglu_kernel(%arg0: i32, %arg1: i32, %arg2: memref<16x32xf32, #tpu.memory_space<vmem>>, %arg3: memref<1x32x256xf32, #tpu.memory_space<vmem>>, %arg4: memref<128x32xf32, #tpu.memory_space<vmem>>, %arg5: memref<16x32xf32, #tpu.memory_space<vmem>>, %arg6: memref<16x32xf32, #tpu.memory_space<vmem>>) attributes {dimension_semantics = [#tpu.dimension_semantics<parallel>, #tpu.dimension_semantics<arbitrary>], iteration_bounds = array<i64: 1, 1>, scalar_prefetch = 0 : i64, scratch_operands = 1 : i64, tpu.core_type = #tpu.core_type<tc>, window_params = [{transform_indices = @transform_0, window_bounds = array<i64: 16, 32>}, {transform_indices = @transform_1, window_bounds = array<i64: 1, 32, 256>}, {transform_indices = @transform_2, window_bounds = array<i64: 128, 32>}, {transform_indices = @transform_3, window_bounds = array<i64: 16, 32>}]} {
    %c0_i32 = arith.constant 0 : i32
    %0 = arith.cmpi eq, %arg1, %c0_i32 : i32
    %1 = arith.extui %0 : i1 to i32
    %c0_i32_0 = arith.constant 0 : i32
    %2 = arith.cmpi ne, %1, %c0_i32_0 : i32
    scf.if %2 {
      %cst_13 = arith.constant 0.000000e+00 : f32
      %24 = vector.broadcast %cst_13 : f32 to vector<16x32xf32>
      %c0_14 = arith.constant 0 : index
      %c0_15 = arith.constant 0 : index
      %25 = vector.load %arg6[%c0_14, %c0_15] : memref<16x32xf32, #tpu.memory_space<vmem>>, vector<16x32xf32>
      tpu.vector_store %arg6[%c0_14, %c0_15], %24 {strides = array<i32>} : memref<16x32xf32, #tpu.memory_space<vmem>>, vector<16x32xf32>,
    } else {
    }
    %c0 = arith.constant 0 : index
    %c0_1 = arith.constant 0 : index
    %3 = vector.load %arg2[%c0, %c0_1] : memref<16x32xf32, #tpu.memory_space<vmem>>, vector<16x32xf32>
    %c0_2 = arith.constant 0 : index
    %c0_3 = arith.constant 0 : index
    %c0_4 = arith.constant 0 : index
    %4 = vector.load %arg3[%c0_2, %c0_3, %c0_4] : memref<1x32x256xf32, #tpu.memory_space<vmem>>, vector<1x32x256xf32>
    %5 = vector.shape_cast %4 : vector<1x32x256xf32> to vector<32x256xf32>
    %cst = arith.constant dense<0.000000e+00> : vector<16x256xf32>
    %6 = tpu.matmul %3, %5, %cst {dimension_numbers = #tpu.dot_dimension_numbers<[1], [0], [0], [1], [0, 0, 1, 1], [], []>} : vector<16x32xf32>, vector<32x256xf32>, vector<16x256xf32> -> vector<16x256xf32>
    %7 = vector.extract_strided_slice %6 {offsets = [0, 0], sizes = [16, 128], strides = [1, 1]} : vector<16x256xf32> to vector<16x128xf32>
    %8 = vector.extract_strided_slice %6 {offsets = [0, 128], sizes = [16, 128], strides = [1, 1]} : vector<16x256xf32> to vector<16x128xf32>
    %9 = arith.negf %7 : vector<16x128xf32>
    %10 = math.exp %9 : vector<16x128xf32>
    %cst_5 = arith.constant 1.000000e+00 : f32
    %11 = vector.broadcast %cst_5 : f32 to vector<16x128xf32>
    %12 = arith.addf %11, %10 : vector<16x128xf32>
    %13 = arith.divf %11, %12 : vector<16x128xf32>
    %14 = arith.mulf %7, %13 : vector<16x128xf32>
    %15 = arith.mulf %14, %8 : vector<16x128xf32>
    %c0_6 = arith.constant 0 : index
    %c0_7 = arith.constant 0 : index
    %16 = vector.load %arg4[%c0_6, %c0_7] : memref<128x32xf32, #tpu.memory_space<vmem>>, vector<128x32xf32>
    %cst_8 = arith.constant dense<0.000000e+00> : vector<16x32xf32>
    %17 = tpu.matmul %15, %16, %cst_8 {dimension_numbers = #tpu.dot_dimension_numbers<[1], [0], [0], [1], [0, 0, 1, 1], [], []>} : vector<16x128xf32>, vector<128x32xf32>, vector<16x32xf32> -> vector<16x32xf32>
    %c0_i32_9 = arith.constant 0 : i32
    %18 = arith.cmpi slt, %arg1, %c0_i32_9 : i32
    %19 = arith.extui %18 : i1 to i32
    %c0_i32_10 = arith.constant 0 : i32
    %20 = arith.cmpi ne, %19, %c0_i32_10 : i32
    scf.if %20 {
      %c0_13 = arith.constant 0 : index
      %c0_14 = arith.constant 0 : index
      %24 = vector.load %arg6[%c0_13, %c0_14] : memref<16x32xf32, #tpu.memory_space<vmem>>, vector<16x32xf32>
      %25 = arith.addf %24, %17 : vector<16x32xf32>
      %c0_15 = arith.constant 0 : index
      %c0_16 = arith.constant 0 : index
      %26 = vector.load %arg6[%c0_15, %c0_16] : memref<16x32xf32, #tpu.memory_space<vmem>>, vector<16x32xf32>
      tpu.vector_store %arg6[%c0_15, %c0_16], %25 {strides = array<i32>} : memref<16x32xf32, #tpu.memory_space<vmem>>, vector<16x32xf32>,
    } else {
    }
    %c0_i32_11 = arith.constant 0 : i32
    %21 = arith.cmpi eq, %arg1, %c0_i32_11 : i32
    %22 = arith.extui %21 : i1 to i32
    %c0_i32_12 = arith.constant 0 : i32
    %23 = arith.cmpi ne, %22, %c0_i32_12 : i32
    scf.if %23 {
      %c0_13 = arith.constant 0 : index
      %c0_14 = arith.constant 0 : index
      %24 = vector.load %arg6[%c0_13, %c0_14] : memref<16x32xf32, #tpu.memory_space<vmem>>, vector<16x32xf32>
      %25 = arith.addf %24, %17 : vector<16x32xf32>
      %c0_15 = arith.constant 0 : index
      %c0_16 = arith.constant 0 : index
      %26 = vector.load %arg5[%c0_15, %c0_16] : memref<16x32xf32, #tpu.memory_space<vmem>>, vector<16x32xf32>
      tpu.vector_store %arg5[%c0_15, %c0_16], %25 {strides = array<i32>} : memref<16x32xf32, #tpu.memory_space<vmem>>, vector<16x32xf32>,
    } else {
    }
    return
  }
  func.func @transform_0(%arg0: i32, %arg1: i32) -> (i32, i32) {
    %c0_i32 = arith.constant 0 : i32
    %c0_i32_0 = arith.constant 0 : i32
    return %arg0, %c0_i32 : i32, i32
  }
  func.func @transform_1(%arg0: i32, %arg1: i32) -> (i32, i32, i32) {
    %c0_i32 = arith.constant 0 : i32
    %c0_i32_0 = arith.constant 0 : i32
    %c0_i32_1 = arith.constant 0 : i32
    return %arg1, %c0_i32, %c0_i32_0 : i32, i32, i32
  }
  func.func @transform_2(%arg0: i32, %arg1: i32) -> (i32, i32) {
    %c0_i32 = arith.constant 0 : i32
    %c0_i32_0 = arith.constant 0 : i32
    return %arg1, %c0_i32 : i32, i32
  }
  func.func @transform_3(%arg0: i32, %arg1: i32) -> (i32, i32) {
    %c0_i32 = arith.constant 0 : i32
    %c0_i32_0 = arith.constant 0 : i32
    return %arg0, %c0_i32 : i32, i32
  }
}

</mosaic_0001>

<llo_original>
// kernel: swiglu_mlp.1
$region0: #{swiglu_mlp.1}
  #allocation0 [shape = 'u32[]', space=smem, size = 0x4, offset = 0x4, fixed_abs, tag = 'smem constant byte address 0x4 - core index']
  #allocation1 [shape = 'u32[72,128]{1,0:T(1,128)}', space=vmem, size = 0x9000, scoped, tag = 'internal scratch']
  #allocation2 [shape = 'f32[16,32]{1,0:T(8,128)}', space=vmem, size = 0x2000, scoped, tag = 'scratch operand']
  %s0 = inlined_call_operand.vmem [shape: f32[16,32], index: 0, kind: input, shape index: {}]
  %s1 = inlined_call_operand.vmem [shape: f32[1,32,256], index: 1, kind: input, shape index: {}]
  %s2 = inlined_call_operand.vmem [shape: f32[128,32], index: 2, kind: input, shape index: {}]
  %s3 = inlined_call_operand.hbm [shape: f32[16,32], index: 3, kind: output, shape index: {}]
  %s4 = sld [smem:[#allocation0]]
  $region34: #{swiglu_mlp.1} parent=0
    _
  %s6 = ssub.s32 1, %s4
  %s7 = scalar_select 0, %s6, %s4
  $region1: #{swiglu_mlp.1} parent=0
    #allocation3 [shape = 'u8[8192]{0}', space=vmem, size = 0x2000, scoped, tag = 'output window, operand 0, single buffered']
    #allocation4 [shape = 's32[1]{0}', space=sflag, size = 0x4, scoped, tag = 'scoped memory for swiglu_mlp.1']
    %8 = vsyncpa [#allocation4], 0
    // Predicated region
    $region2: #{swiglu_mlp.1} parent=1 // pred_check
      _
    $region3: #{swiglu_mlp.1} parent=1 // pred_check_branch
      %10 = sbr.rel (0) target = $region5
    $region4: #{swiglu_mlp.1} parent=1 // pred_region
      _
    $region5: #{swiglu_mlp.1} parent=1 // pred_fallthru
      _
    // Predicated region
    $region6: #{swiglu_mlp.1} parent=1 // pred_check
      _
    $region7: #{swiglu_mlp.1} parent=1 // pred_check_branch
      %12 = sbr.rel (0) target = $region9
    $region8: #{swiglu_mlp.1} parent=1 // pred_region
      _
    $region9: #{swiglu_mlp.1} parent=1 // pred_fallthru
      _
    // Predicated region
    $region10: #{swiglu_mlp.1} parent=1 // pred_check
      _
    $region11: #{swiglu_mlp.1} parent=1 // pred_check_branch
      %14 = sbr.rel (0) target = $region13
    $region12: #{swiglu_mlp.1} parent=1 // pred_region
      _
    $region13: #{swiglu_mlp.1} parent=1 // pred_fallthru
      _
    %p15 = scmp.eq.s32.totalorder 0, 0
    // Predicated region
    $region14: #{swiglu_mlp.1} parent=1 // pred_check
      %p16 = pneg %p15
    $region15: #{swiglu_mlp.1} parent=1 // pred_check_branch
      %18 = sbr.rel (%p16) target = $region17
    $region16: #{swiglu_mlp.1} parent=1 // pred_region
      %vm19 = vcmask 261120
      %20 = vst.msk [vmem:[#allocation2] sm:$0xff] %vm19, 0.0
      %21 = vst.msk [vmem:[#allocation2 + $0x8] sm:$0xff] %vm19, 0.0
    $region17: #{swiglu_mlp.1} parent=1 // pred_fallthru
      _
    %v22 = vld [vmem:[%s0] sm:$0xff]
    %v23 = vld [vmem:[%s0 + $0x8] sm:$0xff]
    %v24 = vld [vmem:[%s1] sm:$0xff]
    %v25 = vld [vmem:[%s1 + $0x8] sm:$0xff]
    %v26 = vld [vmem:[%s1 + $0x10] sm:$0xff]
    %v27 = vld [vmem:[%s1 + $0x18] sm:$0xff]
    %v28 = vld [vmem:[%s1 + $0x20] sm:$0xff]
    %v29 = vld [vmem:[%s1 + $0x28] sm:$0xff]
    %v30 = vld [vmem:[%s1 + $0x30] sm:$0xff]
    %v31 = vld [vmem:[%s1 + $0x38] sm:$0xff]
    %vm32 = vcmask 261120
    %v34 = vsel %vm32, %v22, 0
    %v37 = vsel %vm32, %v23, 0
    %39 = vmatpush.msra.mxu0 0.0
    %40 = vmatpush.msra.mxu0 0.0
    %41 = vmatpush.msra.mxu0 0.0
    %42 = vmatpush.msra.mxu0 0.0
    %43 = vmatpush.msra.mxu0 0.0
    %44 = vmatpush.msra.mxu0 0.0
    %45 = vmatpush.msra.mxu0 0.0
    %46 = vmatpush.msra.mxu0 0.0
    %47 = vmatpush.msra.mxu0 0.0
    %48 = vmatpush.msra.mxu0 0.0
    %49 = vmatpush.msra.mxu0 0.0
    %50 = vmatpush.msra.mxu0 0.0
    %51 = vmatpush.msra.mxu0 %v30
    %52 = vmatpush.msra.mxu0 %v28
    %53 = vmatpush.msra.mxu0 %v26
    %54 = vmatpush.msra.mxu0 %v24
    %55 = vmatmul.f32.gmra.mxu0 %v34
    %v56 = vpop.f32.mrf.mxu0
    %v57 = vadd.f32 0.0, %v56
    %58 = vmatmul.f32.gmra.mxu0 %v37
    %v59 = vpop.f32.mrf.mxu0
    %v60 = vadd.f32 0.0, %v59
    %61 = vdwg.mxu0
    %62 = vmatpush.msra.mxu0 0.0
    %63 = vmatpush.msra.mxu0 0.0
    %64 = vmatpush.msra.mxu0 0.0
    %65 = vmatpush.msra.mxu0 0.0
    %66 = vmatpush.msra.mxu0 0.0
    %67 = vmatpush.msra.mxu0 0.0
    %68 = vmatpush.msra.mxu0 0.0
    %69 = vmatpush.msra.mxu0 0.0
    %70 = vmatpush.msra.mxu0 0.0
    %71 = vmatpush.msra.mxu0 0.0
    %72 = vmatpush.msra.mxu0 0.0
    %73 = vmatpush.msra.mxu0 0.0
    %74 = vmatpush.msra.mxu0 %v31
    %75 = vmatpush.msra.mxu0 %v29
    %76 = vmatpush.msra.mxu0 %v27
    %77 = vmatpush.msra.mxu0 %v25
    %78 = vmatmul.f32.gmra.mxu0 %v34
    %v79 = vpop.f32.mrf.mxu0
    %v80 = vadd.f32 0.0, %v79
    %81 = vmatmul.f32.gmra.mxu0 %v37
    %v82 = vpop.f32.mrf.mxu0
    %v83 = vadd.f32 0.0, %v82
    %84 = vdwg.mxu0
    %v85 = vxor.u32 %v57, 2147483648
    %v86 = vxor.u32 %v60, 2147483648
    %v87 = vmul.f32 %v85, 1.442695
    %v88 = vpow.pop %v87
    %v89 = vmul.f32 %v86, 1.442695
    %v90 = vpow.pop %v89
    %v91 = vadd.f32 %v88, 1.0
    %v92 = vadd.f32 %v90, 1.0
    %v93 = vrcp.pop %v91
    %v94 = vmul.f32 %v91, %v93
    %v95 = vsub.f32 1.0, %v94
    %v96 = vmul.f32 %v93, %v95
    %v97 = vadd.f32 %v93, %v96
    %vm98 = vweird.f32 %v91
    %vm99 = vweird.f32 %v93
    %vm100 = vmor %vm98, %vm99
    %v101 = vsel %vm100, %v93, %v97
    %v102 = vand.u32 2147483647, %v91
    %vm103 = vcmp.eq.f32.partialorder %v102, 8.507059e+37
    %v104 = vand.u32 %v91, 2147483648
    %v105 = vor.u32 1.1754944e-38, %v104
    %v106 = vsel %vm103, %v105, %v101
    %v107 = vmul.f32 1.0, %v106
    %v108 = vrcp.pop %v92
    %v109 = vmul.f32 %v92, %v108
    %v110 = vsub.f32 1.0, %v109
    %v111 = vmul.f32 %v108, %v110
    %v112 = vadd.f32 %v108, %v111
    %vm113 = vweird.f32 %v92
    %vm114 = vweird.f32 %v108
    %vm115 = vmor %vm113, %vm114
    %v116 = vsel %vm115, %v108, %v112
    %v117 = vand.u32 2147483647, %v92
    %vm118 = vcmp.eq.f32.partialorder %v117, 8.507059e+37
    %v119 = vand.u32 %v92, 2147483648
    %v120 = vor.u32 1.1754944e-38, %v119
    %v121 = vsel %vm118, %v120, %v116
    %v122 = vmul.f32 1.0, %v121
    %v123 = vmul.f32 %v57, %v107
    %v124 = vmul.f32 %v60, %v122
    %v125 = vmul.f32 %v123, %v80
    %v126 = vmul.f32 %v124, %v83
    %v127 = vld [vmem:[%s2] sm:$0xff]
    %v128 = vld [vmem:[%s2 + $0x8] sm:$0xff]
    %v129 = vld [vmem:[%s2 + $0x10] sm:$0xff]
    %v130 = vld [vmem:[%s2 + $0x18] sm:$0xff]
    %v131 = vld [vmem:[%s2 + $0x20] sm:$0xff]
    %v132 = vld [vmem:[%s2 + $0x28] sm:$0xff]
    %v133 = vld [vmem:[%s2 + $0x30] sm:$0xff]
    %v134 = vld [vmem:[%s2 + $0x38] sm:$0xff]
    %v135 = vld [vmem:[%s2 + $0x40] sm:$0xff]
    %v136 = vld [vmem:[%s2 + $0x48] sm:$0xff]
    %v137 = vld [vmem:[%s2 + $0x50] sm:$0xff]
    %v138 = vld [vmem:[%s2 + $0x58] sm:$0xff]
    %v139 = vld [vmem:[%s2 + $0x60] sm:$0xff]
    %v140 = vld [vmem:[%s2 + $0x68] sm:$0xff]
    %v141 = vld [vmem:[%s2 + $0x70] sm:$0xff]
    %v142 = vld [vmem:[%s2 + $0x78] sm:$0xff]
    %143 = vmatpush.msra.mxu0 %v142
    %144 = vmatpush.msra.mxu0 %v141
    %145 = vmatpush.msra.mxu0 %v140
    %146 = vmatpush.msra.mxu0 %v139
    %147 = vmatpush.msra.mxu0 %v138
    %148 = vmatpush.msra.mxu0 %v137
    %149 = vmatpush.msra.mxu0 %v136
    %150 = vmatpush.msra.mxu0 %v135
    %151 = vmatpush.msra.mxu0 %v134
    %152 = vmatpush.msra.mxu0 %v133
    %153 = vmatpush.msra.mxu0 %v132
    %154 = vmatpush.msra.mxu0 %v131
    %155 = vmatpush.msra.mxu0 %v130
    %156 = vmatpush.msra.mxu0 %v129
    %157 = vmatpush.msra.mxu0 %v128
    %158 = vmatpush.msra.mxu0 %v127
    %159 = vmatmul.f32.gmra.mxu0 %v125
    %v160 = vpop.f32.mrf.mxu0
    %v161 = vadd.f32 0.0, %v160
    %162 = vmatmul.f32.gmra.mxu0 %v126
    %v163 = vpop.f32.mrf.mxu0
    %v164 = vadd.f32 0.0, %v163
    %165 = vdwg.mxu0
    %p166 = scmp.lt.s32.totalorder 0, 0
    // Predicated region
    $region18: #{swiglu_mlp.1} parent=1 // pred_check
      %p167 = pneg %p166
    $region19: #{swiglu_mlp.1} parent=1 // pred_check_branch
      %169 = sbr.rel (%p167) target = $region21
    $region20: #{swiglu_mlp.1} parent=1 // pred_region
      %v170 = vld [vmem:[#allocation2] sm:$0xff]
      %v171 = vld [vmem:[#allocation2 + $0x8] sm:$0xff]
      %v172 = vadd.f32 %v170, %v161
      %v173 = vadd.f32 %v171, %v164
      %174 = vst.msk [vmem:[#allocation2] sm:$0xff] %vm32, %v172
      %175 = vst.msk [vmem:[#allocation2 + $0x8] sm:$0xff] %vm32, %v173
    $region21: #{swiglu_mlp.1} parent=1 // pred_fallthru
      _
    // Predicated region
    $region22: #{swiglu_mlp.1} parent=1 // pred_check
      %p176 = pneg %p15
    $region23: #{swiglu_mlp.1} parent=1 // pred_check_branch
      %178 = sbr.rel (%p176) target = $region25
    $region24: #{swiglu_mlp.1} parent=1 // pred_region
      %v179 = vld [vmem:[#allocation2] sm:$0xff]
      %v180 = vld [vmem:[#allocation2 + $0x8] sm:$0xff]
      %v181 = vadd.f32 %v179, %v161
      %v182 = vadd.f32 %v180, %v164
      %183 = vst.msk [vmem:[#allocation3] sm:$0xff] %vm32, %v181
      %184 = vst.msk [vmem:[#allocation3 + $0x8] sm:$0xff] %vm32, %v182
    $region25: #{swiglu_mlp.1} parent=1 // pred_fallthru
      _
    // Predicated region
    $region26: #{swiglu_mlp.1} parent=1 // pred_check
      _
    $region27: #{swiglu_mlp.1} parent=1 // pred_check_branch
      %186 = sbr.rel (0) target = $region29
    $region28: #{swiglu_mlp.1} parent=1 // pred_region
      %188 = vsyncadd [#allocation4], 0
      %s189 = sshll.u32 [#allocation3], 4
      %s190 = int_to_ptr.vmem [resolvable:$true] %s189
      %s191 = sshll.u32 %s3, 4
      %s192 = int_to_ptr.hbm [resolvable:$true] %s191
      %197 = dma.vmem_to_hbm [thread:$0]  %s190, 256, %s192, [#allocation4], 128, 128, 8
    $region29: #{swiglu_mlp.1} parent=1 // pred_fallthru
      _
    // Predicated region
    $region30: #{swiglu_mlp.1} parent=1 // pred_check
      _
    $region31: #{swiglu_mlp.1} parent=1 // pred_check_branch
      %199 = sbr.rel (0) target = $region33
    $region32: #{swiglu_mlp.1} parent=1 // pred_region
      %201 = dma.done [#allocation4], 256
    $region33: #{swiglu_mlp.1} parent=1 // pred_fallthru
      _
    %202 = vsyncpa [#allocation4], 1

</llo_original>
